<compile_context>
chip_gen: v6e
topology: v6e:2x2x1
jax: 0.10.0
libtpu: 0.0.40
codegen_flags: <defaults>
</compile_context>

<pallas_src>
import functools
import math
from dataclasses import dataclass

import jax
import jax.numpy as jnp
from jax.experimental import pallas as pl
from jax.experimental.pallas import tpu as pltpu


@dataclass
class GPTConfig:
    n_embed: int = 32
    n_heads: int = 4
    dropout: float = 0.0      # eval-mode / p=0 -> dropout is identity
    bias: bool = True
    block_size: int = 8


# ---------------------------------------------------------------------------
# Single fused kernel: c_attn + causal softmax attention + transpose(1,2).view
# reshuffle + c_proj.  Everything stays resident in VMEM; one invocation.
# ---------------------------------------------------------------------------
def _fused_csa_kernel(x_ref, wqkv_ref, bqkv_ref, wproj_ref, bproj_ref,
                      sel_ref, causal_ref, o_ref, *, B, T, C):
    f32 = jnp.float32
    G = C // T

    # c_attn for the whole batch: one lane-dense (B*T, C) @ (C, 3C) MXU matmul.
    # The 1/sqrt(C) attention scale is pre-folded into the Q columns of
    # wqkv/bqkv by the wrapper, so no per-element scaling happens here.
    qkv = jnp.dot(x_ref[...], wqkv_ref[...], preferred_element_type=f32) + bqkv_ref[...]

    causal = causal_ref[...]                      # (T, T) additive mask (0 / -1e30)

    resh = []
    for b in range(B):                            # B is tiny & static -> unrolled
        r0 = b * T
        q = qkv[r0:r0 + T, 0:C]                   # already scaled by 1/sqrt(C)
        k = qkv[r0:r0 + T, C:2 * C]
        v = qkv[r0:r0 + T, 2 * C:3 * C]

        s = jnp.dot(q, k.T, preferred_element_type=f32) + causal       # (T, T)
        m = jnp.max(s, axis=-1, keepdims=True)
        p = jnp.exp(s - m)
        denom = jnp.sum(p, axis=-1, keepdims=True)
        att = p * pl.reciprocal(denom, approx=True)                    # EUP slot
        # TODO(synk): attn_dropout omitted (eval semantics / dropout_p = 0).

        ctx = jnp.dot(att, v, preferred_element_type=f32)              # (T, C)

        # Reference does out.transpose(1, 2).contiguous().view(B, T, C):
        #   reshuffled[t, g*T + s] = ctx[s, G*t + g]
        # Implemented on the VMEM tile with exact 0/1 selection matmuls
        # (MXU, bit-exact), a sublane-aligned concat and one 2-D transpose.
        cols = [jnp.dot(ctx, sel_ref[g], preferred_element_type=f32)   # (T, T) == ctx[:, g::G]
                for g in range(G)]
        resh.append(jnp.concatenate(cols, axis=0).T)                   # (T, C)

    y = jnp.concatenate(resh, axis=0) if B > 1 else resh[0]            # (B*T, C)

    # c_proj for the whole batch: one (B*T, C) @ (C, C) matmul + bias.
    o_ref[...] = jnp.dot(y, wproj_ref[...], preferred_element_type=f32) + bproj_ref[...]
    # TODO(synk): resid_dropout omitted (eval semantics / dropout_p = 0).


def causal_self_attention(x, params, cfg: GPTConfig):
    B, T, C = x.shape
    assert C == cfg.n_embed
    # The selection-matmul reshuffle decomposition assumes T divides C
    # (true for the reference config: C=32, T=block_size=8).
    assert C % T == 0, "reshuffle decomposition requires n_embed % T == 0"
    G = C // T

    # Weights pre-transposed to (in, out) so kernels compute y = x @ W + b;
    # 1/sqrt(C) attention scale folded into the Q columns at trace time.
    scale = 1.0 / math.sqrt(C)
    col_scale = jnp.concatenate(
        [jnp.full((1, C), scale, jnp.float32), jnp.ones((1, 2 * C), jnp.float32)],
        axis=1)
    wqkv_t = params["wqkv"].T * col_scale                      # (C, 3C)
    bqkv = params["bqkv"].reshape(1, 3 * C) * col_scale        # (1, 3C)
    wproj_t = params["wproj"].T                                # (C, C)
    bproj = params["bproj"].reshape(1, C)                      # (1, C)

    # Exact 0/1 selection tensors: sel[g, c, t] = 1 iff c == G*t + g.
    g_idx = jnp.arange(G)[:, None, None]
    c_idx = jnp.arange(C)[None, :, None]
    t_idx = jnp.arange(T)[None, None, :]
    sel = (c_idx == G * t_idx + g_idx).astype(jnp.float32)     # (G, C, T)

    # Precomputed additive causal bias (hoisted out of the kernel).
    causal = jnp.where(jnp.arange(T)[:, None] >= jnp.arange(T)[None, :],
                       0.0, -1e30).astype(jnp.float32)         # (T, T)

    # Lane-dense 2-D activation slab (free reshape, row-major contiguous).
    x2d = x.reshape(B * T, C)

    kernel = functools.partial(_fused_csa_kernel, B=B, T=T, C=C)
    vmem = pltpu.MemorySpace.VMEM
    y2d = pl.pallas_call(
        kernel,
        out_shape=jax.ShapeDtypeStruct((B * T, C), jnp.float32),
        in_specs=[pl.BlockSpec(memory_space=vmem)] * 7,
        out_specs=pl.BlockSpec(memory_space=vmem),
    )(x2d, wqkv_t, bqkv, wproj_t, bproj, sel, causal)

    return y2d.reshape(B, T, C)                                # free reshape


# ---------------------------------------------------------------------------
# Pure-JAX reference (mirrors the PyTorch forward, eval mode) for validation.
# ---------------------------------------------------------------------------
def _reference(x, params, cfg: GPTConfig):
    B, T, C = x.shape
    qkv = x @ params["wqkv"].T + params["bqkv"]
    q, k, v = qkv[..., :C], qkv[..., C:2 * C], qkv[..., 2 * C:]
    scores = jnp.einsum("btc,bsc->bts", q, k) / math.sqrt(C)
    mask = jnp.tril(jnp.ones((T, T), dtype=bool))
    scores = jnp.where(mask[None], scores, -jnp.inf)
    att = jax.nn.softmax(scores, axis=-1)
    out = jnp.einsum("bts,bsc->btc", att, v)
    out = jnp.transpose(out, (0, 2, 1)).reshape(B, T, C)
    return out @ params["wproj"].T + params["bproj"]


def _init_params(key, cfg: GPTConfig):
    C = cfg.n_embed
    k1, k2, k3, k4 = jax.random.split(key, 4)
    return {
        "wqkv": jax.random.normal(k1, (3 * C, C), jnp.float32) * 0.02,
        "bqkv": (jax.random.normal(k2, (3 * C,), jnp.float32) * 0.02
                 if cfg.bias else jnp.zeros((3 * C,), jnp.float32)),
        "wproj": jax.random.normal(k3, (C, C), jnp.float32) * 0.02,
        "bproj": jax.random.normal(k4, (C,), jnp.float32) * 0.02,
    }


if __name__ == "__main__":
    cfg = GPTConfig(n_embed=32, n_heads=4, dropout=0.0, bias=True, block_size=8)
    B, T, C = 2, cfg.block_size, cfg.n_embed

    key = jax.random.PRNGKey(0)
    kx, kp = jax.random.split(key)
    x = jax.random.normal(kx, (B, T, C), jnp.float32)
    params = _init_params(kp, cfg)

    y = causal_self_attention(x, params, cfg)
    y = jax.block_until_ready(y)

    y_ref = _reference(x, params, cfg)
    assert y.shape == (B, T, C)
    # Tolerance relaxed from 1e-5 to 2e-4 solely because of the approx EUP
    # reciprocal in the softmax (and the scale folding's reordered rounding).
    assert jnp.allclose(y, y_ref, atol=2e-4, rtol=2e-4), "mismatch vs reference"

    print("KERNEL_OK")
</pallas_src>

<mosaic_0001>
module attributes {stable_mosaic.version = 11 : i64} {
  func.func @_fused_csa_kernel(%arg0: memref<16x32xf32, #tpu.memory_space<vmem>>, %arg1: memref<32x96xf32, #tpu.memory_space<vmem>>, %arg2: memref<1x96xf32, #tpu.memory_space<vmem>>, %arg3: memref<32x32xf32, #tpu.memory_space<vmem>>, %arg4: memref<1x32xf32, #tpu.memory_space<vmem>>, %arg5: memref<4x32x8xf32, #tpu.memory_space<vmem>>, %arg6: memref<8x8xf32, #tpu.memory_space<vmem>>, %arg7: memref<16x32xf32, #tpu.memory_space<vmem>>) attributes {dimension_semantics = [], scalar_prefetch = 0 : i64, scratch_operands = 0 : i64, tpu.core_type = #tpu.core_type<tc>} {
    %c0 = arith.constant 0 : index
    %c0_0 = arith.constant 0 : index
    %0 = vector.load %arg0[%c0, %c0_0] : memref<16x32xf32, #tpu.memory_space<vmem>>, vector<16x32xf32>
    %c0_1 = arith.constant 0 : index
    %c0_2 = arith.constant 0 : index
    %1 = vector.load %arg1[%c0_1, %c0_2] : memref<32x96xf32, #tpu.memory_space<vmem>>, vector<32x96xf32>
    %cst = arith.constant dense<0.000000e+00> : vector<16x96xf32>
    %2 = tpu.matmul %0, %1, %cst {dimension_numbers = #tpu.dot_dimension_numbers<[1], [0], [0], [1], [0, 0, 1, 1], [], []>} : vector<16x32xf32>, vector<32x96xf32>, vector<16x96xf32> -> vector<16x96xf32>
    %c0_3 = arith.constant 0 : index
    %c0_4 = arith.constant 0 : index
    %3 = vector.load %arg2[%c0_3, %c0_4] : memref<1x96xf32, #tpu.memory_space<vmem>>, vector<1x96xf32>
    %4 = vector.broadcast %3 : vector<1x96xf32> to vector<16x96xf32>
    %5 = arith.addf %2, %4 : vector<16x96xf32>
    %c0_5 = arith.constant 0 : index
    %c0_6 = arith.constant 0 : index
    %6 = vector.load %arg6[%c0_5, %c0_6] : memref<8x8xf32, #tpu.memory_space<vmem>>, vector<8x8xf32>
    %7 = vector.extract_strided_slice %5 {offsets = [0, 0], sizes = [8, 32], strides = [1, 1]} : vector<16x96xf32> to vector<8x32xf32>
    %8 = vector.extract_strided_slice %5 {offsets = [0, 32], sizes = [8, 32], strides = [1, 1]} : vector<16x96xf32> to vector<8x32xf32>
    %9 = vector.extract_strided_slice %5 {offsets = [0, 64], sizes = [8, 32], strides = [1, 1]} : vector<16x96xf32> to vector<8x32xf32>
    %10 = tpu.transpose %8, [1, 0] : vector<8x32xf32> -> vector<32x8xf32>
    %cst_7 = arith.constant dense<0.000000e+00> : vector<8x8xf32>
    %11 = tpu.matmul %7, %10, %cst_7 {dimension_numbers = #tpu.dot_dimension_numbers<[1], [0], [0], [1], [0, 0, 1, 1], [], []>} : vector<8x32xf32>, vector<32x8xf32>, vector<8x8xf32> -> vector<8x8xf32>
    %12 = arith.addf %11, %6 : vector<8x8xf32>
    %cst_8 = arith.constant dense<0xFF800000> : vector<8xf32>
    %13 = vector.multi_reduction <maximumf>, %12, %cst_8 [1] : vector<8x8xf32> to vector<8xf32>
    %14 = vector.shape_cast %13 : vector<8xf32> to vector<8x1xf32>
    %15 = vector.broadcast %14 : vector<8x1xf32> to vector<8x8xf32>
    %16 = arith.subf %12, %15 : vector<8x8xf32>
    %17 = math.exp %16 : vector<8x8xf32>
    %cst_9 = arith.constant dense<0.000000e+00> : vector<8xf32>
    %18 = vector.multi_reduction <add>, %17, %cst_9 [1] : vector<8x8xf32> to vector<8xf32>
    %19 = vector.shape_cast %18 : vector<8xf32> to vector<8x1xf32>
    %20 = tpu.reciprocal %19 {approx = true} : vector<8x1xf32> -> vector<8x1xf32>
    %21 = vector.broadcast %20 : vector<8x1xf32> to vector<8x8xf32>
    %22 = arith.mulf %17, %21 : vector<8x8xf32>
    %cst_10 = arith.constant dense<0.000000e+00> : vector<8x32xf32>
    %23 = tpu.matmul %22, %9, %cst_10 {dimension_numbers = #tpu.dot_dimension_numbers<[1], [0], [0], [1], [0, 0, 1, 1], [], []>} : vector<8x8xf32>, vector<8x32xf32>, vector<8x32xf32> -> vector<8x32xf32>
    %c0_11 = arith.constant 0 : index
    %c0_12 = arith.constant 0 : index
    %c0_13 = arith.constant 0 : index
    %24 = vector.load %arg5[%c0_11, %c0_12, %c0_13] : memref<4x32x8xf32, #tpu.memory_space<vmem>>, vector<1x32x8xf32>
    %25 = vector.shape_cast %24 : vector<1x32x8xf32> to vector<32x8xf32>
    %cst_14 = arith.constant dense<0.000000e+00> : vector<8x8xf32>
    %26 = tpu.matmul %23, %25, %cst_14 {dimension_numbers = #tpu.dot_dimension_numbers<[1], [0], [0], [1], [0, 0, 1, 1], [], []>} : vector<8x32xf32>, vector<32x8xf32>, vector<8x8xf32> -> vector<8x8xf32>
    %c1 = arith.constant 1 : index
    %c0_15 = arith.constant 0 : index
    %c0_16 = arith.constant 0 : index
    %27 = vector.load %arg5[%c1, %c0_15, %c0_16] : memref<4x32x8xf32, #tpu.memory_space<vmem>>, vector<1x32x8xf32>
    %28 = vector.shape_cast %27 : vector<1x32x8xf32> to vector<32x8xf32>
    %cst_17 = arith.constant dense<0.000000e+00> : vector<8x8xf32>
    %29 = tpu.matmul %23, %28, %cst_17 {dimension_numbers = #tpu.dot_dimension_numbers<[1], [0], [0], [1], [0, 0, 1, 1], [], []>} : vector<8x32xf32>, vector<32x8xf32>, vector<8x8xf32> -> vector<8x8xf32>
    %c2 = arith.constant 2 : index
    %c0_18 = arith.constant 0 : index
    %c0_19 = arith.constant 0 : index
    %30 = vector.load %arg5[%c2, %c0_18, %c0_19] : memref<4x32x8xf32, #tpu.memory_space<vmem>>, vector<1x32x8xf32>
    %31 = vector.shape_cast %30 : vector<1x32x8xf32> to vector<32x8xf32>
    %cst_20 = arith.constant dense<0.000000e+00> : vector<8x8xf32>
    %32 = tpu.matmul %23, %31, %cst_20 {dimension_numbers = #tpu.dot_dimension_numbers<[1], [0], [0], [1], [0, 0, 1, 1], [], []>} : vector<8x32xf32>, vector<32x8xf32>, vector<8x8xf32> -> vector<8x8xf32>
    %c3 = arith.constant 3 : index
    %c0_21 = arith.constant 0 : index
    %c0_22 = arith.constant 0 : index
    %33 = vector.load %arg5[%c3, %c0_21, %c0_22] : memref<4x32x8xf32, #tpu.memory_space<vmem>>, vector<1x32x8xf32>
    %34 = vector.shape_cast %33 : vector<1x32x8xf32> to vector<32x8xf32>
    %cst_23 = arith.constant dense<0.000000e+00> : vector<8x8xf32>
    %35 = tpu.matmul %23, %34, %cst_23 {dimension_numbers = #tpu.dot_dimension_numbers<[1], [0], [0], [1], [0, 0, 1, 1], [], []>} : vector<8x32xf32>, vector<32x8xf32>, vector<8x8xf32> -> vector<8x8xf32>
    %36 = tpu.concatenate %26, %29, %32, %35 in 0 : vector<8x8xf32>, vector<8x8xf32>, vector<8x8xf32>, vector<8x8xf32> -> vector<32x8xf32>
    %37 = tpu.transpose %36, [1, 0] : vector<32x8xf32> -> vector<8x32xf32>
    %38 = vector.extract_strided_slice %5 {offsets = [8, 0], sizes = [8, 32], strides = [1, 1]} : vector<16x96xf32> to vector<8x32xf32>
    %39 = vector.extract_strided_slice %5 {offsets = [8, 32], sizes = [8, 32], strides = [1, 1]} : vector<16x96xf32> to vector<8x32xf32>
    %40 = vector.extract_strided_slice %5 {offsets = [8, 64], sizes = [8, 32], strides = [1, 1]} : vector<16x96xf32> to vector<8x32xf32>
    %41 = tpu.transpose %39, [1, 0] : vector<8x32xf32> -> vector<32x8xf32>
    %cst_24 = arith.constant dense<0.000000e+00> : vector<8x8xf32>
    %42 = tpu.matmul %38, %41, %cst_24 {dimension_numbers = #tpu.dot_dimension_numbers<[1], [0], [0], [1], [0, 0, 1, 1], [], []>} : vector<8x32xf32>, vector<32x8xf32>, vector<8x8xf32> -> vector<8x8xf32>
    %43 = arith.addf %42, %6 : vector<8x8xf32>
    %cst_25 = arith.constant dense<0xFF800000> : vector<8xf32>
    %44 = vector.multi_reduction <maximumf>, %43, %cst_25 [1] : vector<8x8xf32> to vector<8xf32>
    %45 = vector.shape_cast %44 : vector<8xf32> to vector<8x1xf32>
    %46 = vector.broadcast %45 : vector<8x1xf32> to vector<8x8xf32>
    %47 = arith.subf %43, %46 : vector<8x8xf32>
    %48 = math.exp %47 : vector<8x8xf32>
    %cst_26 = arith.constant dense<0.000000e+00> : vector<8xf32>
    %49 = vector.multi_reduction <add>, %48, %cst_26 [1] : vector<8x8xf32> to vector<8xf32>
    %50 = vector.shape_cast %49 : vector<8xf32> to vector<8x1xf32>
    %51 = tpu.reciprocal %50 {approx = true} : vector<8x1xf32> -> vector<8x1xf32>
    %52 = vector.broadcast %51 : vector<8x1xf32> to vector<8x8xf32>
    %53 = arith.mulf %48, %52 : vector<8x8xf32>
    %cst_27 = arith.constant dense<0.000000e+00> : vector<8x32xf32>
    %54 = tpu.matmul %53, %40, %cst_27 {dimension_numbers = #tpu.dot_dimension_numbers<[1], [0], [0], [1], [0, 0, 1, 1], [], []>} : vector<8x8xf32>, vector<8x32xf32>, vector<8x32xf32> -> vector<8x32xf32>
    %c0_28 = arith.constant 0 : index
    %c0_29 = arith.constant 0 : index
    %c0_30 = arith.constant 0 : index
    %55 = vector.load %arg5[%c0_28, %c0_29, %c0_30] : memref<4x32x8xf32, #tpu.memory_space<vmem>>, vector<1x32x8xf32>
    %56 = vector.shape_cast %55 : vector<1x32x8xf32> to vector<32x8xf32>
    %cst_31 = arith.constant dense<0.000000e+00> : vector<8x8xf32>
    %57 = tpu.matmul %54, %56, %cst_31 {dimension_numbers = #tpu.dot_dimension_numbers<[1], [0], [0], [1], [0, 0, 1, 1], [], []>} : vector<8x32xf32>, vector<32x8xf32>, vector<8x8xf32> -> vector<8x8xf32>
    %c1_32 = arith.constant 1 : index
    %c0_33 = arith.constant 0 : index
    %c0_34 = arith.constant 0 : index
    %58 = vector.load %arg5[%c1_32, %c0_33, %c0_34] : memref<4x32x8xf32, #tpu.memory_space<vmem>>, vector<1x32x8xf32>
    %59 = vector.shape_cast %58 : vector<1x32x8xf32> to vector<32x8xf32>
    %cst_35 = arith.constant dense<0.000000e+00> : vector<8x8xf32>
    %60 = tpu.matmul %54, %59, %cst_35 {dimension_numbers = #tpu.dot_dimension_numbers<[1], [0], [0], [1], [0, 0, 1, 1], [], []>} : vector<8x32xf32>, vector<32x8xf32>, vector<8x8xf32> -> vector<8x8xf32>
    %c2_36 = arith.constant 2 : index
    %c0_37 = arith.constant 0 : index
    %c0_38 = arith.constant 0 : index
    %61 = vector.load %arg5[%c2_36, %c0_37, %c0_38] : memref<4x32x8xf32, #tpu.memory_space<vmem>>, vector<1x32x8xf32>
    %62 = vector.shape_cast %61 : vector<1x32x8xf32> to vector<32x8xf32>
    %cst_39 = arith.constant dense<0.000000e+00> : vector<8x8xf32>
    %63 = tpu.matmul %54, %62, %cst_39 {dimension_numbers = #tpu.dot_dimension_numbers<[1], [0], [0], [1], [0, 0, 1, 1], [], []>} : vector<8x32xf32>, vector<32x8xf32>, vector<8x8xf32> -> vector<8x8xf32>
    %c3_40 = arith.constant 3 : index
    %c0_41 = arith.constant 0 : index
    %c0_42 = arith.constant 0 : index
    %64 = vector.load %arg5[%c3_40, %c0_41, %c0_42] : memref<4x32x8xf32, #tpu.memory_space<vmem>>, vector<1x32x8xf32>
    %65 = vector.shape_cast %64 : vector<1x32x8xf32> to vector<32x8xf32>
    %cst_43 = arith.constant dense<0.000000e+00> : vector<8x8xf32>
    %66 = tpu.matmul %54, %65, %cst_43 {dimension_numbers = #tpu.dot_dimension_numbers<[1], [0], [0], [1], [0, 0, 1, 1], [], []>} : vector<8x32xf32>, vector<32x8xf32>, vector<8x8xf32> -> vector<8x8xf32>
    %67 = tpu.concatenate %57, %60, %63, %66 in 0 : vector<8x8xf32>, vector<8x8xf32>, vector<8x8xf32>, vector<8x8xf32> -> vector<32x8xf32>
    %68 = tpu.transpose %67, [1, 0] : vector<32x8xf32> -> vector<8x32xf32>
    %69 = tpu.concatenate %37, %68 in 0 : vector<8x32xf32>, vector<8x32xf32> -> vector<16x32xf32>
    %c0_44 = arith.constant 0 : index
    %c0_45 = arith.constant 0 : index
    %70 = vector.load %arg3[%c0_44, %c0_45] : memref<32x32xf32, #tpu.memory_space<vmem>>, vector<32x32xf32>
    %cst_46 = arith.constant dense<0.000000e+00> : vector<16x32xf32>
    %71 = tpu.matmul %69, %70, %cst_46 {dimension_numbers = #tpu.dot_dimension_numbers<[1], [0], [0], [1], [0, 0, 1, 1], [], []>} : vector<16x32xf32>, vector<32x32xf32>, vector<16x32xf32> -> vector<16x32xf32>
    %c0_47 = arith.constant 0 : index
    %c0_48 = arith.constant 0 : index
    %72 = vector.load %arg4[%c0_47, %c0_48] : memref<1x32xf32, #tpu.memory_space<vmem>>, vector<1x32xf32>
    %73 = vector.broadcast %72 : vector<1x32xf32> to vector<16x32xf32>
    %74 = arith.addf %71, %73 : vector<16x32xf32>
    %c0_49 = arith.constant 0 : index
    %c0_50 = arith.constant 0 : index
    %75 = vector.load %arg7[%c0_49, %c0_50] : memref<16x32xf32, #tpu.memory_space<vmem>>, vector<16x32xf32>
    tpu.vector_store %arg7[%c0_49, %c0_50], %74 {strides = array<i32>} : memref<16x32xf32, #tpu.memory_space<vmem>>, vector<16x32xf32>,
    return
  }
}

</mosaic_0001>

<llo_original>
// kernel: tpu_custom_call.1
$region0: #{tpu_custom_call.1}
  #allocation0 [shape = 'u32[]', space=smem, size = 0x4, offset = 0x4, fixed_abs, tag = 'smem constant byte address 0x4 - core index']
  #allocation1 [shape = 'u32[144,128]{1,0:T(1,128)}', space=vmem, size = 0x12000, scoped, tag = 'internal scratch']
  %s0 = inlined_call_operand.vmem [shape: f32[16,32], index: 0, kind: input, shape index: {}]
  %s1 = inlined_call_operand.vmem [shape: f32[32,96], index: 1, kind: input, shape index: {}]
  %s2 = inlined_call_operand.vmem [shape: f32[1,96], index: 2, kind: input, shape index: {}]
  %s3 = inlined_call_operand.vmem [shape: f32[32,32], index: 3, kind: input, shape index: {}]
  %s4 = inlined_call_operand.vmem [shape: f32[1,32], index: 4, kind: input, shape index: {}]
  %s5 = inlined_call_operand.vmem [shape: f32[4,32,8], index: 5, kind: input, shape index: {}]
  %s6 = inlined_call_operand.vmem [shape: f32[8,8], index: 6, kind: input, shape index: {}]
  %s7 = inlined_call_operand.hbm [shape: f32[16,32], index: 7, kind: output, shape index: {}]
  %s8 = sld [smem:[#allocation0]]
  $region38: #{tpu_custom_call.1} parent=0
    _
  %s10 = ssub.s32 1, %s8
  %s11 = scalar_select 0, %s10, %s8
  $region1: #{tpu_custom_call.1} parent=0
    #allocation2 [shape = 'u8[8192]{0}', space=vmem, size = 0x2000, scoped, tag = 'output window, operand 0, single buffered']
    #allocation3 [shape = 's32[1]{0}', space=sflag, size = 0x4, scoped, tag = 'scoped memory for tpu_custom_call.1']
    %12 = vsyncpa [#allocation3], 0
    // Predicated region
    $region2: #{tpu_custom_call.1} parent=1 // pred_check
      _
    $region3: #{tpu_custom_call.1} parent=1 // pred_check_branch
      %14 = sbr.rel (0) target = $region5
    $region4: #{tpu_custom_call.1} parent=1 // pred_region
      _
    $region5: #{tpu_custom_call.1} parent=1 // pred_fallthru
      _
    // Predicated region
    $region6: #{tpu_custom_call.1} parent=1 // pred_check
      _
    $region7: #{tpu_custom_call.1} parent=1 // pred_check_branch
      %16 = sbr.rel (0) target = $region9
    $region8: #{tpu_custom_call.1} parent=1 // pred_region
      _
    $region9: #{tpu_custom_call.1} parent=1 // pred_fallthru
      _
    // Predicated region
    $region10: #{tpu_custom_call.1} parent=1 // pred_check
      _
    $region11: #{tpu_custom_call.1} parent=1 // pred_check_branch
      %18 = sbr.rel (0) target = $region13
    $region12: #{tpu_custom_call.1} parent=1 // pred_region
      _
    $region13: #{tpu_custom_call.1} parent=1 // pred_fallthru
      _
    // Predicated region
    $region14: #{tpu_custom_call.1} parent=1 // pred_check
      _
    $region15: #{tpu_custom_call.1} parent=1 // pred_check_branch
      %20 = sbr.rel (0) target = $region17
    $region16: #{tpu_custom_call.1} parent=1 // pred_region
      _
    $region17: #{tpu_custom_call.1} parent=1 // pred_fallthru
      _
    // Predicated region
    $region18: #{tpu_custom_call.1} parent=1 // pred_check
      _
    $region19: #{tpu_custom_call.1} parent=1 // pred_check_branch
      %22 = sbr.rel (0) target = $region21
    $region20: #{tpu_custom_call.1} parent=1 // pred_region
      _
    $region21: #{tpu_custom_call.1} parent=1 // pred_fallthru
      _
    // Predicated region
    $region22: #{tpu_custom_call.1} parent=1 // pred_check
      _
    $region23: #{tpu_custom_call.1} parent=1 // pred_check_branch
      %24 = sbr.rel (0) target = $region25
    $region24: #{tpu_custom_call.1} parent=1 // pred_region
      _
    $region25: #{tpu_custom_call.1} parent=1 // pred_fallthru
      _
    // Predicated region
    $region26: #{tpu_custom_call.1} parent=1 // pred_check
      _
    $region27: #{tpu_custom_call.1} parent=1 // pred_check_branch
      %26 = sbr.rel (0) target = $region29
    $region28: #{tpu_custom_call.1} parent=1 // pred_region
      _
    $region29: #{tpu_custom_call.1} parent=1 // pred_fallthru
      _
    %v27 = vld [vmem:[%s0] sm:$0xff]
    %v28 = vld [vmem:[%s0 + $0x8] sm:$0xff]
    %v29 = vld [vmem:[%s1] sm:$0xff]
    %v30 = vld [vmem:[%s1 + $0x8] sm:$0xff]
    %v31 = vld [vmem:[%s1 + $0x10] sm:$0xff]
    %v32 = vld [vmem:[%s1 + $0x18] sm:$0xff]
    %v33 = vld [vmem:[%s2] sm:$0x1]
    %v35 = vlaneseq
    %v36 = vshrl.u32 %v35, 7
    %v37 = vsub.s32 0, %v36
    %v38 = vrot.slane %v33, %v37
    %vm40 = vcmask 261120
    %v42 = vsel %vm40, %v27, 0
    %v45 = vsel %vm40, %v28, 0
    %47 = vmatprep.subr.mxu0 0.0
    %48 = vmatpush1.msra.mxu0 0.0
    %49 = vmatprep.subr.mxu0 0.0
    %50 = vmatpush1.msra.mxu0 0.0
    %51 = vmatprep.subr.mxu0 0.0
    %52 = vmatpush1.msra.mxu0 0.0
    %53 = vmatprep.subr.mxu0 0.0
    %54 = vmatpush1.msra.mxu0 0.0
    %55 = vmatprep.subr.mxu0 0.0
    %56 = vmatpush1.msra.mxu0 0.0
    %57 = vmatprep.subr.mxu0 0.0
    %58 = vmatpush1.msra.mxu0 0.0
    %59 = vmatprep.subr.mxu0 0.0
    %60 = vmatpush1.msra.mxu0 0.0
    %61 = vmatprep.subr.mxu0 0.0
    %62 = vmatpush1.msra.mxu0 0.0
    %63 = vmatprep.subr.mxu0 0.0
    %64 = vmatpush1.msra.mxu0 0.0
    %65 = vmatprep.subr.mxu0 0.0
    %66 = vmatpush1.msra.mxu0 0.0
    %67 = vmatprep.subr.mxu0 0.0
    %68 = vmatpush1.msra.mxu0 0.0
    %69 = vmatprep.subr.mxu0 0.0
    %70 = vmatpush1.msra.mxu0 0.0
    %71 = vmatprep.subr.mxu0 0.0
    %72 = vmatpush1.msra.mxu0 %v32
    %73 = vmatprep.subr.mxu0 0.0
    %74 = vmatpush1.msra.mxu0 %v31
    %75 = vmatprep.subr.mxu0 0.0
    %76 = vmatpush1.msra.mxu0 %v30
    %77 = vmatprep.subr.mxu0 0.0
    %78 = vmatpush1.msra.mxu0 %v29
    %79 = vmatprep.subr.mxu0 0.0
    %80 = vmatpush2.msra.mxu0 0.0
    %81 = vmatprep.subr.mxu0 0.0
    %82 = vmatpush2.msra.mxu0 0.0
    %83 = vmatprep.subr.mxu0 0.0
    %84 = vmatpush2.msra.mxu0 0.0
    %85 = vmatprep.subr.mxu0 0.0
    %86 = vmatpush2.msra.mxu0 0.0
    %87 = vmatprep.subr.mxu0 0.0
    %88 = vmatpush2.msra.mxu0 0.0
    %89 = vmatprep.subr.mxu0 0.0
    %90 = vmatpush2.msra.mxu0 0.0
    %91 = vmatprep.subr.mxu0 0.0
    %92 = vmatpush2.msra.mxu0 0.0
    %93 = vmatprep.subr.mxu0 0.0
    %94 = vmatpush2.msra.mxu0 0.0
    %95 = vmatprep.subr.mxu0 0.0
    %96 = vmatpush2.msra.mxu0 0.0
    %97 = vmatprep.subr.mxu0 0.0
    %98 = vmatpush2.msra.mxu0 0.0
    %99 = vmatprep.subr.mxu0 0.0
    %100 = vmatpush2.msra.mxu0 0.0
    %101 = vmatprep.subr.mxu0 0.0
    %102 = vmatpush2.msra.mxu0 0.0
    %103 = vmatprep.subr.mxu0 0.0
    %104 = vmatpush2.msra.mxu0 0.0
    %105 = vmatprep.subr.mxu0 0.0
    %106 = vmatpush2.msra.mxu0 0.0
    %107 = vmatprep.subr.mxu0 0.0
    %108 = vmatpush2.msra.mxu0 0.0
    %109 = vmatprep.subr.mxu0 0.0
    %110 = vmatpush2.msra.mxu0 0.0
    %111 = vmatprep.mubr.f32.mxu0 0.0
    %112 = vmatmul.mubr.f32.gmra.mxu0 %v42
    %v113 = vpop.f32.mrf.mxu0
    %v114 = vadd.f32 %v38, %v113
    %v115 = vpop.f32.mrf.mxu0
    %116 = vmatprep.mubr.f32.mxu0 0.0
    %117 = vmatmul.mubr.f32.gmra.mxu0 %v45
    %v118 = vpop.f32.mrf.mxu0
    %v119 = vadd.f32 %v38, %v118
    %v120 = vpop.f32.mrf.mxu0
    %121 = vdwg.mxu0
    %v122 = vld [vmem:[%s6] sm:$0xff]
    %124 = vrot.lane.b32.xlu0 %v114, 96
    %v125 = vpop.permute.xlu0 %124
    %v126 = vsel %vm40, %v114, 0
    %v128 = vsel %vm40, %v125, 0
    %130 = vmatprep.subr.mxu0 0.0
    %131 = vmatpush1.xpose.msra.mxu0 0.0
    %132 = vmatprep.subr.mxu0 0.0
    %133 = vmatpush1.xpose.msra.mxu0 0.0
    %134 = vmatprep.subr.mxu0 0.0
    %135 = vmatpush1.xpose.msra.mxu0 0.0
    %136 = vmatprep.subr.mxu0 0.0
    %137 = vmatpush1.xpose.msra.mxu0 0.0
    %138 = vmatprep.subr.mxu0 0.0
    %139 = vmatpush1.xpose.msra.mxu0 0.0
    %140 = vmatprep.subr.mxu0 0.0
    %141 = vmatpush1.xpose.msra.mxu0 0.0
    %142 = vmatprep.subr.mxu0 0.0
    %143 = vmatpush1.xpose.msra.mxu0 0.0
    %144 = vmatprep.subr.mxu0 0.0
    %145 = vmatpush1.xpose.msra.mxu0 0.0
    %146 = vmatprep.subr.mxu0 0.0
    %147 = vmatpush1.xpose.msra.mxu0 0.0
    %148 = vmatprep.subr.mxu0 0.0
    %149 = vmatpush1.xpose.msra.mxu0 0.0
    %150 = vmatprep.subr.mxu0 0.0
    %151 = vmatpush1.xpose.msra.mxu0 0.0
    %152 = vmatprep.subr.mxu0 0.0
    %153 = vmatpush1.xpose.msra.mxu0 0.0
    %154 = vmatprep.subr.mxu0 0.0
    %155 = vmatpush1.xpose.msra.mxu0 0.0
    %156 = vmatprep.subr.mxu0 0.0
    %157 = vmatpush1.xpose.msra.mxu0 0.0
    %158 = vmatprep.subr.mxu0 0.0
    %159 = vmatpush1.xpose.msra.mxu0 0.0
    %160 = vmatprep.subr.mxu0 0.0
    %161 = vmatpush1.xpose.msra.mxu0 %v128
    %162 = vmatprep.subr.mxu0 0.0
    %163 = vmatpush2.xpose.msra.mxu0 0.0
    %164 = vmatprep.subr.mxu0 0.0
    %165 = vmatpush2.xpose.msra.mxu0 0.0
    %166 = vmatprep.subr.mxu0 0.0
    %167 = vmatpush2.xpose.msra.mxu0 0.0
    %168 = vmatprep.subr.mxu0 0.0
    %169 = vmatpush2.xpose.msra.mxu0 0.0
    %170 = vmatprep.subr.mxu0 0.0
    %171 = vmatpush2.xpose.msra.mxu0 0.0
    %172 = vmatprep.subr.mxu0 0.0
    %173 = vmatpush2.xpose.msra.mxu0 0.0
    %174 = vmatprep.subr.mxu0 0.0
    %175 = vmatpush2.xpose.msra.mxu0 0.0
    %176 = vmatprep.subr.mxu0 0.0
    %177 = vmatpush2.xpose.msra.mxu0 0.0
    %178 = vmatprep.subr.mxu0 0.0
    %179 = vmatpush2.xpose.msra.mxu0 0.0
    %180 = vmatprep.subr.mxu0 0.0
    %181 = vmatpush2.xpose.msra.mxu0 0.0
    %182 = vmatprep.subr.mxu0 0.0
    %183 = vmatpush2.xpose.msra.mxu0 0.0
    %184 = vmatprep.subr.mxu0 0.0
    %185 = vmatpush2.xpose.msra.mxu0 0.0
    %186 = vmatprep.subr.mxu0 0.0
    %187 = vmatpush2.xpose.msra.mxu0 0.0
    %188 = vmatprep.subr.mxu0 0.0
    %189 = vmatpush2.xpose.msra.mxu0 0.0
    %190 = vmatprep.subr.mxu0 0.0
    %191 = vmatpush2.xpose.msra.mxu0 0.0
    %192 = vmatprep.subr.mxu0 0.0
    %193 = vmatpush2.xpose.msra.mxu0 0.0
    %194 = vmatprep.mubr.f32.mxu0 0.0
    %195 = vmatmul.mubr.f32.gmra.mxu0 %v126
    %v196 = vpop.f32.mrf.mxu0
    %v197 = vadd.f32 %v122, %v196
    %v198 = vpop.f32.mrf.mxu0
    %199 = vdwg.mxu0
    %vm200 = vcmask 64512
    %v201 = vsel %vm200, %v197, -inf
    %202 = vmax.xlane.f32.xlu0 %v201
    %v203 = vpop.xlane.xlu0 %202
    %v204 = vsub.f32 %v197, %v203
    %v205 = vmul.f32 %v204, 1.442695
    %v206 = vpow.pop %v205
    %v207 = vsel %vm200, %v206, 0.0
    %208 = vadd.xlane.f32.xlu0 %v207
    %v209 = vpop.xlane.xlu0 %208
    %v210 = vrcp.pop %v209
    %v211 = vmul.f32 %v206, %v210
    %212 = vrot.lane.b32.xlu0 %v114, 64
    %v213 = vpop.permute.xlu0 %212
    %v216 = vsel %vm200, %v211, 0
    %218 = vmatprep.subr.mxu0 0.0
    %219 = vmatpush1.msra.mxu0 0.0
    %220 = vmatprep.subr.mxu0 0.0
    %221 = vmatpush1.msra.mxu0 0.0
    %222 = vmatprep.subr.mxu0 0.0
    %223 = vmatpush1.msra.mxu0 0.0
    %224 = vmatprep.subr.mxu0 0.0
    %225 = vmatpush1.msra.mxu0 0.0
    %226 = vmatprep.subr.mxu0 0.0
    %227 = vmatpush1.msra.mxu0 0.0
    %228 = vmatprep.subr.mxu0 0.0
    %229 = vmatpush1.msra.mxu0 0.0
    %230 = vmatprep.subr.mxu0 0.0
    %231 = vmatpush1.msra.mxu0 0.0
    %232 = vmatprep.subr.mxu0 0.0
    %233 = vmatpush1.msra.mxu0 0.0
    %234 = vmatprep.subr.mxu0 0.0
    %235 = vmatpush1.msra.mxu0 0.0
    %236 = vmatprep.subr.mxu0 0.0
    %237 = vmatpush1.msra.mxu0 0.0
    %238 = vmatprep.subr.mxu0 0.0
    %239 = vmatpush1.msra.mxu0 0.0
    %240 = vmatprep.subr.mxu0 0.0
    %241 = vmatpush1.msra.mxu0 0.0
    %242 = vmatprep.subr.mxu0 0.0
    %243 = vmatpush1.msra.mxu0 0.0
    %244 = vmatprep.subr.mxu0 0.0
    %245 = vmatpush1.msra.mxu0 0.0
    %246 = vmatprep.subr.mxu0 0.0
    %247 = vmatpush1.msra.mxu0 0.0
    %248 = vmatprep.subr.mxu0 0.0
    %249 = vmatpush1.msra.mxu0 %v213
    %250 = vmatprep.subr.mxu0 0.0
    %251 = vmatpush2.msra.mxu0 0.0
    %252 = vmatprep.subr.mxu0 0.0
    %253 = vmatpush2.msra.mxu0 0.0
    %254 = vmatprep.subr.mxu0 0.0
    %255 = vmatpush2.msra.mxu0 0.0
    %256 = vmatprep.subr.mxu0 0.0
    %257 = vmatpush2.msra.mxu0 0.0
    %258 = vmatprep.subr.mxu0 0.0
    %259 = vmatpush2.msra.mxu0 0.0
    %260 = vmatprep.subr.mxu0 0.0
    %261 = vmatpush2.msra.mxu0 0.0
    %262 = vmatprep.subr.mxu0 0.0
    %263 = vmatpush2.msra.mxu0 0.0
    %264 = vmatprep.subr.mxu0 0.0
    %265 = vmatpush2.msra.mxu0 0.0
    %266 = vmatprep.subr.mxu0 0.0
    %267 = vmatpush2.msra.mxu0 0.0
    %268 = vmatprep.subr.mxu0 0.0
    %269 = vmatpush2.msra.mxu0 0.0
    %270 = vmatprep.subr.mxu0 0.0
    %271 = vmatpush2.msra.mxu0 0.0
    %272 = vmatprep.subr.mxu0 0.0
    %273 = vmatpush2.msra.mxu0 0.0
    %274 = vmatprep.subr.mxu0 0.0
    %275 = vmatpush2.msra.mxu0 0.0
    %276 = vmatprep.subr.mxu0 0.0
    %277 = vmatpush2.msra.mxu0 0.0
    %278 = vmatprep.subr.mxu0 0.0
    %279 = vmatpush2.msra.mxu0 0.0
    %280 = vmatprep.subr.mxu0 0.0
    %281 = vmatpush2.msra.mxu0 0.0
    %282 = vmatprep.mubr.f32.mxu0 0.0
    %283 = vmatmul.mubr.f32.gmra.mxu0 %v216
    %v284 = vpop.f32.mrf.mxu0
    %v285 = vadd.f32 0.0, %v284
    %v286 = vpop.f32.mrf.mxu0
    %287 = vdwg.mxu0
    %v288 = vld [vmem:[%s5] sm:$0xff]
    %v289 = vld [vmem:[%s5 + $0x8] sm:$0xff]
    %v290 = vld [vmem:[%s5 + $0x10] sm:$0xff]
    %v291 = vld [vmem:[%s5 + $0x18] sm:$0xff]
    %v293 = vsel %vm40, %v285, 0
    %295 = vmatprep.subr.mxu0 0.0
    %296 = vmatpush1.msra.mxu0 0.0
    %297 = vmatprep.subr.mxu0 0.0
    %298 = vmatpush1.msra.mxu0 0.0
    %299 = vmatprep.subr.mxu0 0.0
    %300 = vmatpush1.msra.mxu0 0.0
    %301 = vmatprep.subr.mxu0 0.0
    %302 = vmatpush1.msra.mxu0 0.0
    %303 = vmatprep.subr.mxu0 0.0
    %304 = vmatpush1.msra.mxu0 0.0
    %305 = vmatprep.subr.mxu0 0.0
    %306 = vmatpush1.msra.mxu0 0.0
    %307 = vmatprep.subr.mxu0 0.0
    %308 = vmatpush1.msra.mxu0 0.0
    %309 = vmatprep.subr.mxu0 0.0
    %310 = vmatpush1.msra.mxu0 0.0
    %311 = vmatprep.subr.mxu0 0.0
    %312 = vmatpush1.msra.mxu0 0.0
    %313 = vmatprep.subr.mxu0 0.0
    %314 = vmatpush1.msra.mxu0 0.0
    %315 = vmatprep.subr.mxu0 0.0
    %316 = vmatpush1.msra.mxu0 0.0
    %317 = vmatprep.subr.mxu0 0.0
    %318 = vmatpush1.msra.mxu0 0.0
    %319 = vmatprep.subr.mxu0 0.0
    %320 = vmatpush1.msra.mxu0 %v291
    %321 = vmatprep.subr.mxu0 0.0
    %322 = vmatpush1.msra.mxu0 %v290
    %323 = vmatprep.subr.mxu0 0.0
    %324 = vmatpush1.msra.mxu0 %v289
    %325 = vmatprep.subr.mxu0 0.0
    %326 = vmatpush1.msra.mxu0 %v288
    %327 = vmatprep.subr.mxu0 0.0
    %328 = vmatpush2.msra.mxu0 0.0
    %329 = vmatprep.subr.mxu0 0.0
    %330 = vmatpush2.msra.mxu0 0.0
    %331 = vmatprep.subr.mxu0 0.0
    %332 = vmatpush2.msra.mxu0 0.0
    %333 = vmatprep.subr.mxu0 0.0
    %334 = vmatpush2.msra.mxu0 0.0
    %335 = vmatprep.subr.mxu0 0.0
    %336 = vmatpush2.msra.mxu0 0.0
    %337 = vmatprep.subr.mxu0 0.0
    %338 = vmatpush2.msra.mxu0 0.0
    %339 = vmatprep.subr.mxu0 0.0
    %340 = vmatpush2.msra.mxu0 0.0
    %341 = vmatprep.subr.mxu0 0.0
    %342 = vmatpush2.msra.mxu0 0.0
    %343 = vmatprep.subr.mxu0 0.0
    %344 = vmatpush2.msra.mxu0 0.0
    %345 = vmatprep.subr.mxu0 0.0
    %346 = vmatpush2.msra.mxu0 0.0
    %347 = vmatprep.subr.mxu0 0.0
    %348 = vmatpush2.msra.mxu0 0.0
    %349 = vmatprep.subr.mxu0 0.0
    %350 = vmatpush2.msra.mxu0 0.0
    %351 = vmatprep.subr.mxu0 0.0
    %352 = vmatpush2.msra.mxu0 0.0
    %353 = vmatprep.subr.mxu0 0.0
    %354 = vmatpush2.msra.mxu0 0.0
    %355 = vmatprep.subr.mxu0 0.0
    %356 = vmatpush2.msra.mxu0 0.0
    %357 = vmatprep.subr.mxu0 0.0
    %358 = vmatpush2.msra.mxu0 0.0
    %359 = vmatprep.mubr.f32.mxu0 0.0
    %360 = vmatmul.mubr.f32.gmra.mxu0 %v293
    %v361 = vpop.f32.mrf.mxu0
    %v362 = vadd.f32 0.0, %v361
    %v363 = vpop.f32.mrf.mxu0
    %364 = vdwg.mxu0
    %s365 = scalar_lea.vmem %s5, 32
    %v366 = vld [vmem:[%s365] sm:$0xff]
    %v367 = vld [vmem:[%s365 + $0x8] sm:$0xff]
    %v368 = vld [vmem:[%s365 + $0x10] sm:$0xff]
    %v369 = vld [vmem:[%s365 + $0x18] sm:$0xff]
    %370 = vmatprep.subr.mxu0 0.0
    %371 = vmatpush1.msra.mxu0 0.0
    %372 = vmatprep.subr.mxu0 0.0
    %373 = vmatpush1.msra.mxu0 0.0
    %374 = vmatprep.subr.mxu0 0.0
    %375 = vmatpush1.msra.mxu0 0.0
    %376 = vmatprep.subr.mxu0 0.0
    %377 = vmatpush1.msra.mxu0 0.0
    %378 = vmatprep.subr.mxu0 0.0
    %379 = vmatpush1.msra.mxu0 0.0
    %380 = vmatprep.subr.mxu0 0.0
    %381 = vmatpush1.msra.mxu0 0.0
    %382 = vmatprep.subr.mxu0 0.0
    %383 = vmatpush1.msra.mxu0 0.0
    %384 = vmatprep.subr.mxu0 0.0
    %385 = vmatpush1.msra.mxu0 0.0
    %386 = vmatprep.subr.mxu0 0.0
    %387 = vmatpush1.msra.mxu0 0.0
    %388 = vmatprep.subr.mxu0 0.0
    %389 = vmatpush1.msra.mxu0 0.0
    %390 = vmatprep.subr.mxu0 0.0
    %391 = vmatpush1.msra.mxu0 0.0
    %392 = vmatprep.subr.mxu0 0.0
    %393 = vmatpush1.msra.mxu0 0.0
    %394 = vmatprep.subr.mxu0 0.0
    %395 = vmatpush1.msra.mxu0 %v369
    %396 = vmatprep.subr.mxu0 0.0
    %397 = vmatpush1.msra.mxu0 %v368
    %398 = vmatprep.subr.mxu0 0.0
    %399 = vmatpush1.msra.mxu0 %v367
    %400 = vmatprep.subr.mxu0 0.0
    %401 = vmatpush1.msra.mxu0 %v366
    %402 = vmatprep.subr.mxu0 0.0
    %403 = vmatpush2.msra.mxu0 0.0
    %404 = vmatprep.subr.mxu0 0.0
    %405 = vmatpush2.msra.mxu0 0.0
    %406 = vmatprep.subr.mxu0 0.0
    %407 = vmatpush2.msra.mxu0 0.0
    %408 = vmatprep.subr.mxu0 0.0
    %409 = vmatpush2.msra.mxu0 0.0
    %410 = vmatprep.subr.mxu0 0.0
    %411 = vmatpush2.msra.mxu0 0.0
    %412 = vmatprep.subr.mxu0 0.0
    %413 = vmatpush2.msra.mxu0 0.0
    %414 = vmatprep.subr.mxu0 0.0
    %415 = vmatpush2.msra.mxu0 0.0
    %416 = vmatprep.subr.mxu0 0.0
    %417 = vmatpush2.msra.mxu0 0.0
    %418 = vmatprep.subr.mxu0 0.0
    %419 = vmatpush2.msra.mxu0 0.0
    %420 = vmatprep.subr.mxu0 0.0
    %421 = vmatpush2.msra.mxu0 0.0
    %422 = vmatprep.subr.mxu0 0.0
    %423 = vmatpush2.msra.mxu0 0.0
    %424 = vmatprep.subr.mxu0 0.0
    %425 = vmatpush2.msra.mxu0 0.0
    %426 = vmatprep.subr.mxu0 0.0
    %427 = vmatpush2.msra.mxu0 0.0
    %428 = vmatprep.subr.mxu0 0.0
    %429 = vmatpush2.msra.mxu0 0.0
    %430 = vmatprep.subr.mxu0 0.0
    %431 = vmatpush2.msra.mxu0 0.0
    %432 = vmatprep.subr.mxu0 0.0
    %433 = vmatpush2.msra.mxu0 0.0
    %434 = vmatprep.mubr.f32.mxu0 0.0
    %435 = vmatmul.mubr.f32.gmra.mxu0 %v293
    %v436 = vpop.f32.mrf.mxu0
    %v437 = vadd.f32 0.0, %v436
    %v438 = vpop.f32.mrf.mxu0
    %439 = vdwg.mxu0
    %s440 = scalar_lea.vmem %s5, 64
    %v441 = vld [vmem:[%s440] sm:$0xff]
    %v442 = vld [vmem:[%s440 + $0x8] sm:$0xff]
    %v443 = vld [vmem:[%s440 + $0x10] sm:$0xff]
    %v444 = vld [vmem:[%s440 + $0x18] sm:$0xff]
    %445 = vmatprep.subr.mxu0 0.0
    %446 = vmatpush1.msra.mxu0 0.0
    %447 = vmatprep.subr.mxu0 0.0
    %448 = vmatpush1.msra.mxu0 0.0
    %449 = vmatprep.subr.mxu0 0.0
    %450 = vmatpush1.msra.mxu0 0.0
    %451 = vmatprep.subr.mxu0 0.0
    %452 = vmatpush1.msra.mxu0 0.0
    %453 = vmatprep.subr.mxu0 0.0
    %454 = vmatpush1.msra.mxu0 0.0
    %455 = vmatprep.subr.mxu0 0.0
    %456 = vmatpush1.msra.mxu0 0.0
    %457 = vmatprep.subr.mxu0 0.0
    %458 = vmatpush1.msra.mxu0 0.0
    %459 = vmatprep.subr.mxu0 0.0
    %460 = vmatpush1.msra.mxu0 0.0
    %461 = vmatprep.subr.mxu0 0.0
    %462 = vmatpush1.msra.mxu0 0.0
    %463 = vmatprep.subr.mxu0 0.0
    %464 = vmatpush1.msra.mxu0 0.0
    %465 = vmatprep.subr.mxu0 0.0
    %466 = vmatpush1.msra.mxu0 0.0
    %467 = vmatprep.subr.mxu0 0.0
    %468 = vmatpush1.msra.mxu0 0.0
    %469 = vmatprep.subr.mxu0 0.0
    %470 = vmatpush1.msra.mxu0 %v444
    %471 = vmatprep.subr.mxu0 0.0
    %472 = vmatpush1.msra.mxu0 %v443
    %473 = vmatprep.subr.mxu0 0.0
    %474 = vmatpush1.msra.mxu0 %v442
    %475 = vmatprep.subr.mxu0 0.0
    %476 = vmatpush1.msra.mxu0 %v441
    %477 = vmatprep.subr.mxu0 0.0
    %478 = vmatpush2.msra.mxu0 0.0
    %479 = vmatprep.subr.mxu0 0.0
    %480 = vmatpush2.msra.mxu0 0.0
    %481 = vmatprep.subr.mxu0 0.0
    %482 = vmatpush2.msra.mxu0 0.0
    %483 = vmatprep.subr.mxu0 0.0
    %484 = vmatpush2.msra.mxu0 0.0
    %485 = vmatprep.subr.mxu0 0.0
    %486 = vmatpush2.msra.mxu0 0.0
    %487 = vmatprep.subr.mxu0 0.0
    %488 = vmatpush2.msra.mxu0 0.0
    %489 = vmatprep.subr.mxu0 0.0
    %490 = vmatpush2.msra.mxu0 0.0
    %491 = vmatprep.subr.mxu0 0.0
    %492 = vmatpush2.msra.mxu0 0.0
    %493 = vmatprep.subr.mxu0 0.0
    %494 = vmatpush2.msra.mxu0 0.0
    %495 = vmatprep.subr.mxu0 0.0
    %496 = vmatpush2.msra.mxu0 0.0
    %497 = vmatprep.subr.mxu0 0.0
    %498 = vmatpush2.msra.mxu0 0.0
    %499 = vmatprep.subr.mxu0 0.0
    %500 = vmatpush2.msra.mxu0 0.0
    %501 = vmatprep.subr.mxu0 0.0
    %502 = vmatpush2.msra.mxu0 0.0
    %503 = vmatprep.subr.mxu0 0.0
    %504 = vmatpush2.msra.mxu0 0.0
    %505 = vmatprep.subr.mxu0 0.0
    %506 = vmatpush2.msra.mxu0 0.0
    %507 = vmatprep.subr.mxu0 0.0
    %508 = vmatpush2.msra.mxu0 0.0
    %509 = vmatprep.mubr.f32.mxu0 0.0
    %510 = vmatmul.mubr.f32.gmra.mxu0 %v293
    %v511 = vpop.f32.mrf.mxu0
    %v512 = vadd.f32 0.0, %v511
    %v513 = vpop.f32.mrf.mxu0
    %514 = vdwg.mxu0
    %s515 = scalar_lea.vmem %s5, 96
    %v516 = vld [vmem:[%s515] sm:$0xff]
    %v517 = vld [vmem:[%s515 + $0x8] sm:$0xff]
    %v518 = vld [vmem:[%s515 + $0x10] sm:$0xff]
    %v519 = vld [vmem:[%s515 + $0x18] sm:$0xff]
    %520 = vmatprep.subr.mxu0 0.0
    %521 = vmatpush1.msra.mxu0 0.0
    %522 = vmatprep.subr.mxu0 0.0
    %523 = vmatpush1.msra.mxu0 0.0
    %524 = vmatprep.subr.mxu0 0.0
    %525 = vmatpush1.msra.mxu0 0.0
    %526 = vmatprep.subr.mxu0 0.0
    %527 = vmatpush1.msra.mxu0 0.0
    %528 = vmatprep.subr.mxu0 0.0
    %529 = vmatpush1.msra.mxu0 0.0
    %530 = vmatprep.subr.mxu0 0.0
    %531 = vmatpush1.msra.mxu0 0.0
    %532 = vmatprep.subr.mxu0 0.0
    %533 = vmatpush1.msra.mxu0 0.0
    %534 = vmatprep.subr.mxu0 0.0
    %535 = vmatpush1.msra.mxu0 0.0
    %536 = vmatprep.subr.mxu0 0.0
    %537 = vmatpush1.msra.mxu0 0.0
    %538 = vmatprep.subr.mxu0 0.0
    %539 = vmatpush1.msra.mxu0 0.0
    %540 = vmatprep.subr.mxu0 0.0
    %541 = vmatpush1.msra.mxu0 0.0
    %542 = vmatprep.subr.mxu0 0.0
    %543 = vmatpush1.msra.mxu0 0.0
    %544 = vmatprep.subr.mxu0 0.0
    %545 = vmatpush1.msra.mxu0 %v519
    %546 = vmatprep.subr.mxu0 0.0
    %547 = vmatpush1.msra.mxu0 %v518
    %548 = vmatprep.subr.mxu0 0.0
    %549 = vmatpush1.msra.mxu0 %v517
    %550 = vmatprep.subr.mxu0 0.0
    %551 = vmatpush1.msra.mxu0 %v516
    %552 = vmatprep.subr.mxu0 0.0
    %553 = vmatpush2.msra.mxu0 0.0
    %554 = vmatprep.subr.mxu0 0.0
    %555 = vmatpush2.msra.mxu0 0.0
    %556 = vmatprep.subr.mxu0 0.0
    %557 = vmatpush2.msra.mxu0 0.0
    %558 = vmatprep.subr.mxu0 0.0
    %559 = vmatpush2.msra.mxu0 0.0
    %560 = vmatprep.subr.mxu0 0.0
    %561 = vmatpush2.msra.mxu0 0.0
    %562 = vmatprep.subr.mxu0 0.0
    %563 = vmatpush2.msra.mxu0 0.0
    %564 = vmatprep.subr.mxu0 0.0
    %565 = vmatpush2.msra.mxu0 0.0
    %566 = vmatprep.subr.mxu0 0.0
    %567 = vmatpush2.msra.mxu0 0.0
    %568 = vmatprep.subr.mxu0 0.0
    %569 = vmatpush2.msra.mxu0 0.0
    %570 = vmatprep.subr.mxu0 0.0
    %571 = vmatpush2.msra.mxu0 0.0
    %572 = vmatprep.subr.mxu0 0.0
    %573 = vmatpush2.msra.mxu0 0.0
    %574 = vmatprep.subr.mxu0 0.0
    %575 = vmatpush2.msra.mxu0 0.0
    %576 = vmatprep.subr.mxu0 0.0
    %577 = vmatpush2.msra.mxu0 0.0
    %578 = vmatprep.subr.mxu0 0.0
    %579 = vmatpush2.msra.mxu0 0.0
    %580 = vmatprep.subr.mxu0 0.0
    %581 = vmatpush2.msra.mxu0 0.0
    %582 = vmatprep.subr.mxu0 0.0
    %583 = vmatpush2.msra.mxu0 0.0
    %584 = vmatprep.mubr.f32.mxu0 0.0
    %585 = vmatmul.mubr.f32.gmra.mxu0 %v293
    %v586 = vpop.f32.mrf.mxu0
    %v587 = vadd.f32 0.0, %v586
    %v588 = vpop.f32.mrf.mxu0
    %589 = vdwg.mxu0
    %590 = vxpose.xlu0.b32.start [1/16] %v362, 128
    %591 = vxpose.xlu0.b32.cont [2/16] %v437, 128
    %592 = vxpose.xlu0.b32.cont [3/16] %v512, 128
    %593 = vxpose.xlu0.b32.cont [4/16] %v587, 128
    %594 = vxpose.xlu0.b32.cont [5/16] 0.0, 128
    %595 = vxpose.xlu0.b32.cont [6/16] 0.0, 128
    %596 = vxpose.xlu0.b32.cont [7/16] 0.0, 128
    %597 = vxpose.xlu0.b32.cont [8/16] 0.0, 128
    %598 = vxpose.xlu0.b32.cont [9/16] 0.0, 128
    %599 = vxpose.xlu0.b32.cont [10/16] 0.0, 128
    %600 = vxpose.xlu0.b32.cont [11/16] 0.0, 128
    %601 = vxpose.xlu0.b32.cont [12/16] 0.0, 128
    %602 = vxpose.xlu0.b32.cont [13/16] 0.0, 128
    %603 = vxpose.xlu0.b32.cont [14/16] 0.0, 128
    %604 = vxpose.xlu0.b32.cont [15/16] 0.0, 128
    %605 = vxpose.xlu0.b32.end [16/16] 0.0, 128
    %v606 = vpop.trf.xlu0
    %v607 = vpop.trf.xlu0
    %v608 = vpop.trf.xlu0
    %v609 = vpop.trf.xlu0
    %v610 = vpop.trf.xlu0
    %v611 = vpop.trf.xlu0
    %v612 = vpop.trf.xlu0
    %v613 = vpop.trf.xlu0
    %v614 = vpop.trf.xlu0
    %v615 = vpop.trf.xlu0
    %v616 = vpop.trf.xlu0
    %v617 = vpop.trf.xlu0
    %v618 = vpop.trf.xlu0
    %v619 = vpop.trf.xlu0
    %v620 = vpop.trf.xlu0
    %v621 = vpop.trf.xlu0
    %623 = vrot.lane.b32.xlu0 %v119, 96
    %v624 = vpop.permute.xlu0 %623
    %v625 = vsel %vm40, %v119, 0
    %v627 = vsel %vm40, %v624, 0
    %629 = vmatprep.subr.mxu0 0.0
    %630 = vmatpush1.xpose.msra.mxu0 0.0
    %631 = vmatprep.subr.mxu0 0.0
    %632 = vmatpush1.xpose.msra.mxu0 0.0
    %633 = vmatprep.subr.mxu0 0.0
    %634 = vmatpush1.xpose.msra.mxu0 0.0
    %635 = vmatprep.subr.mxu0 0.0
    %636 = vmatpush1.xpose.msra.mxu0 0.0
    %637 = vmatprep.subr.mxu0 0.0
    %638 = vmatpush1.xpose.msra.mxu0 0.0
    %639 = vmatprep.subr.mxu0 0.0
    %640 = vmatpush1.xpose.msra.mxu0 0.0
    %641 = vmatprep.subr.mxu0 0.0
    %642 = vmatpush1.xpose.msra.mxu0 0.0
    %643 = vmatprep.subr.mxu0 0.0
    %644 = vmatpush1.xpose.msra.mxu0 0.0
    %645 = vmatprep.subr.mxu0 0.0
    %646 = vmatpush1.xpose.msra.mxu0 0.0
    %647 = vmatprep.subr.mxu0 0.0
    %648 = vmatpush1.xpose.msra.mxu0 0.0
    %649 = vmatprep.subr.mxu0 0.0
    %650 = vmatpush1.xpose.msra.mxu0 0.0
    %651 = vmatprep.subr.mxu0 0.0
    %652 = vmatpush1.xpose.msra.mxu0 0.0
    %653 = vmatprep.subr.mxu0 0.0
    %654 = vmatpush1.xpose.msra.mxu0 0.0
    %655 = vmatprep.subr.mxu0 0.0
    %656 = vmatpush1.xpose.msra.mxu0 0.0
    %657 = vmatprep.subr.mxu0 0.0
    %658 = vmatpush1.xpose.msra.mxu0 0.0
    %659 = vmatprep.subr.mxu0 0.0
    %660 = vmatpush1.xpose.msra.mxu0 %v627
    %661 = vmatprep.subr.mxu0 0.0
    %662 = vmatpush2.xpose.msra.mxu0 0.0
    %663 = vmatprep.subr.mxu0 0.0
    %664 = vmatpush2.xpose.msra.mxu0 0.0
    %665 = vmatprep.subr.mxu0 0.0
    %666 = vmatpush2.xpose.msra.mxu0 0.0
    %667 = vmatprep.subr.mxu0 0.0
    %668 = vmatpush2.xpose.msra.mxu0 0.0
    %669 = vmatprep.subr.mxu0 0.0
    %670 = vmatpush2.xpose.msra.mxu0 0.0
    %671 = vmatprep.subr.mxu0 0.0
    %672 = vmatpush2.xpose.msra.mxu0 0.0
    %673 = vmatprep.subr.mxu0 0.0
    %674 = vmatpush2.xpose.msra.mxu0 0.0
    %675 = vmatprep.subr.mxu0 0.0
    %676 = vmatpush2.xpose.msra.mxu0 0.0
    %677 = vmatprep.subr.mxu0 0.0
    %678 = vmatpush2.xpose.msra.mxu0 0.0
    %679 = vmatprep.subr.mxu0 0.0
    %680 = vmatpush2.xpose.msra.mxu0 0.0
    %681 = vmatprep.subr.mxu0 0.0
    %682 = vmatpush2.xpose.msra.mxu0 0.0
    %683 = vmatprep.subr.mxu0 0.0
    %684 = vmatpush2.xpose.msra.mxu0 0.0
    %685 = vmatprep.subr.mxu0 0.0
    %686 = vmatpush2.xpose.msra.mxu0 0.0
    %687 = vmatprep.subr.mxu0 0.0
    %688 = vmatpush2.xpose.msra.mxu0 0.0
    %689 = vmatprep.subr.mxu0 0.0
    %690 = vmatpush2.xpose.msra.mxu0 0.0
    %691 = vmatprep.subr.mxu0 0.0
    %692 = vmatpush2.xpose.msra.mxu0 0.0
    %693 = vmatprep.mubr.f32.mxu0 0.0
    %694 = vmatmul.mubr.f32.gmra.mxu0 %v625
    %v695 = vpop.f32.mrf.mxu0
    %v696 = vadd.f32 %v122, %v695
    %v697 = vpop.f32.mrf.mxu0
    %698 = vdwg.mxu0
    %v699 = vsel %vm200, %v696, -inf
    %700 = vmax.xlane.f32.xlu0 %v699
    %v701 = vpop.xlane.xlu0 %700
    %v702 = vsub.f32 %v696, %v701
    %v703 = vmul.f32 %v702, 1.442695
    %v704 = vpow.pop %v703
    %v705 = vsel %vm200, %v704, 0.0
    %706 = vadd.xlane.f32.xlu0 %v705
    %v707 = vpop.xlane.xlu0 %706
    %v708 = vrcp.pop %v707
    %v709 = vmul.f32 %v704, %v708
    %710 = vrot.lane.b32.xlu0 %v119, 64
    %v711 = vpop.permute.xlu0 %710
    %v714 = vsel %vm200, %v709, 0
    %716 = vmatprep.subr.mxu0 0.0
    %717 = vmatpush1.msra.mxu0 0.0
    %718 = vmatprep.subr.mxu0 0.0
    %719 = vmatpush1.msra.mxu0 0.0
    %720 = vmatprep.subr.mxu0 0.0
    %721 = vmatpush1.msra.mxu0 0.0
    %722 = vmatprep.subr.mxu0 0.0
    %723 = vmatpush1.msra.mxu0 0.0
    %724 = vmatprep.subr.mxu0 0.0
    %725 = vmatpush1.msra.mxu0 0.0
    %726 = vmatprep.subr.mxu0 0.0
    %727 = vmatpush1.msra.mxu0 0.0
    %728 = vmatprep.subr.mxu0 0.0
    %729 = vmatpush1.msra.mxu0 0.0
    %730 = vmatprep.subr.mxu0 0.0
    %731 = vmatpush1.msra.mxu0 0.0
    %732 = vmatprep.subr.mxu0 0.0
    %733 = vmatpush1.msra.mxu0 0.0
    %734 = vmatprep.subr.mxu0 0.0
    %735 = vmatpush1.msra.mxu0 0.0
    %736 = vmatprep.subr.mxu0 0.0
    %737 = vmatpush1.msra.mxu0 0.0
    %738 = vmatprep.subr.mxu0 0.0
    %739 = vmatpush1.msra.mxu0 0.0
    %740 = vmatprep.subr.mxu0 0.0
    %741 = vmatpush1.msra.mxu0 0.0
    %742 = vmatprep.subr.mxu0 0.0
    %743 = vmatpush1.msra.mxu0 0.0
    %744 = vmatprep.subr.mxu0 0.0
    %745 = vmatpush1.msra.mxu0 0.0
    %746 = vmatprep.subr.mxu0 0.0
    %747 = vmatpush1.msra.mxu0 %v711
    %748 = vmatprep.subr.mxu0 0.0
    %749 = vmatpush2.msra.mxu0 0.0
    %750 = vmatprep.subr.mxu0 0.0
    %751 = vmatpush2.msra.mxu0 0.0
    %752 = vmatprep.subr.mxu0 0.0
    %753 = vmatpush2.msra.mxu0 0.0
    %754 = vmatprep.subr.mxu0 0.0
    %755 = vmatpush2.msra.mxu0 0.0
    %756 = vmatprep.subr.mxu0 0.0
    %757 = vmatpush2.msra.mxu0 0.0
    %758 = vmatprep.subr.mxu0 0.0
    %759 = vmatpush2.msra.mxu0 0.0
    %760 = vmatprep.subr.mxu0 0.0
    %761 = vmatpush2.msra.mxu0 0.0
    %762 = vmatprep.subr.mxu0 0.0
    %763 = vmatpush2.msra.mxu0 0.0
    %764 = vmatprep.subr.mxu0 0.0
    %765 = vmatpush2.msra.mxu0 0.0
    %766 = vmatprep.subr.mxu0 0.0
    %767 = vmatpush2.msra.mxu0 0.0
    %768 = vmatprep.subr.mxu0 0.0
    %769 = vmatpush2.msra.mxu0 0.0
    %770 = vmatprep.subr.mxu0 0.0
    %771 = vmatpush2.msra.mxu0 0.0
    %772 = vmatprep.subr.mxu0 0.0
    %773 = vmatpush2.msra.mxu0 0.0
    %774 = vmatprep.subr.mxu0 0.0
    %775 = vmatpush2.msra.mxu0 0.0
    %776 = vmatprep.subr.mxu0 0.0
    %777 = vmatpush2.msra.mxu0 0.0
    %778 = vmatprep.subr.mxu0 0.0
    %779 = vmatpush2.msra.mxu0 0.0
    %780 = vmatprep.mubr.f32.mxu0 0.0
    %781 = vmatmul.mubr.f32.gmra.mxu0 %v714
    %v782 = vpop.f32.mrf.mxu0
    %v783 = vadd.f32 0.0, %v782
    %v784 = vpop.f32.mrf.mxu0
    %785 = vdwg.mxu0
    %v787 = vsel %vm40, %v783, 0
    %789 = vmatprep.subr.mxu0 0.0
    %790 = vmatpush1.msra.mxu0 0.0
    %791 = vmatprep.subr.mxu0 0.0
    %792 = vmatpush1.msra.mxu0 0.0
    %793 = vmatprep.subr.mxu0 0.0
    %794 = vmatpush1.msra.mxu0 0.0
    %795 = vmatprep.subr.mxu0 0.0
    %796 = vmatpush1.msra.mxu0 0.0
    %797 = vmatprep.subr.mxu0 0.0
    %798 = vmatpush1.msra.mxu0 0.0
    %799 = vmatprep.subr.mxu0 0.0
    %800 = vmatpush1.msra.mxu0 0.0
    %801 = vmatprep.subr.mxu0 0.0
    %802 = vmatpush1.msra.mxu0 0.0
    %803 = vmatprep.subr.mxu0 0.0
    %804 = vmatpush1.msra.mxu0 0.0
    %805 = vmatprep.subr.mxu0 0.0
    %806 = vmatpush1.msra.mxu0 0.0
    %807 = vmatprep.subr.mxu0 0.0
    %808 = vmatpush1.msra.mxu0 0.0
    %809 = vmatprep.subr.mxu0 0.0
    %810 = vmatpush1.msra.mxu0 0.0
    %811 = vmatprep.subr.mxu0 0.0
    %812 = vmatpush1.msra.mxu0 0.0
    %813 = vmatprep.subr.mxu0 0.0
    %814 = vmatpush1.msra.mxu0 %v291
    %815 = vmatprep.subr.mxu0 0.0
    %816 = vmatpush1.msra.mxu0 %v290
    %817 = vmatprep.subr.mxu0 0.0
    %818 = vmatpush1.msra.mxu0 %v289
    %819 = vmatprep.subr.mxu0 0.0
    %820 = vmatpush1.msra.mxu0 %v288
    %821 = vmatprep.subr.mxu0 0.0
    %822 = vmatpush2.msra.mxu0 0.0
    %823 = vmatprep.subr.mxu0 0.0
    %824 = vmatpush2.msra.mxu0 0.0
    %825 = vmatprep.subr.mxu0 0.0
    %826 = vmatpush2.msra.mxu0 0.0
    %827 = vmatprep.subr.mxu0 0.0
    %828 = vmatpush2.msra.mxu0 0.0
    %829 = vmatprep.subr.mxu0 0.0
    %830 = vmatpush2.msra.mxu0 0.0
    %831 = vmatprep.subr.mxu0 0.0
    %832 = vmatpush2.msra.mxu0 0.0
    %833 = vmatprep.subr.mxu0 0.0
    %834 = vmatpush2.msra.mxu0 0.0
    %835 = vmatprep.subr.mxu0 0.0
    %836 = vmatpush2.msra.mxu0 0.0
    %837 = vmatprep.subr.mxu0 0.0
    %838 = vmatpush2.msra.mxu0 0.0
    %839 = vmatprep.subr.mxu0 0.0
    %840 = vmatpush2.msra.mxu0 0.0
    %841 = vmatprep.subr.mxu0 0.0
    %842 = vmatpush2.msra.mxu0 0.0
    %843 = vmatprep.subr.mxu0 0.0
    %844 = vmatpush2.msra.mxu0 0.0
    %845 = vmatprep.subr.mxu0 0.0
    %846 = vmatpush2.msra.mxu0 0.0
    %847 = vmatprep.subr.mxu0 0.0
    %848 = vmatpush2.msra.mxu0 0.0
    %849 = vmatprep.subr.mxu0 0.0
    %850 = vmatpush2.msra.mxu0 0.0
    %851 = vmatprep.subr.mxu0 0.0
    %852 = vmatpush2.msra.mxu0 0.0
    %853 = vmatprep.mubr.f32.mxu0 0.0
    %854 = vmatmul.mubr.f32.gmra.mxu0 %v787
    %v855 = vpop.f32.mrf.mxu0
    %v856 = vadd.f32 0.0, %v855
    %v857 = vpop.f32.mrf.mxu0
    %858 = vdwg.mxu0
    %859 = vmatprep.subr.mxu0 0.0
    %860 = vmatpush1.msra.mxu0 0.0
    %861 = vmatprep.subr.mxu0 0.0
    %862 = vmatpush1.msra.mxu0 0.0
    %863 = vmatprep.subr.mxu0 0.0
    %864 = vmatpush1.msra.mxu0 0.0
    %865 = vmatprep.subr.mxu0 0.0
    %866 = vmatpush1.msra.mxu0 0.0
    %867 = vmatprep.subr.mxu0 0.0
    %868 = vmatpush1.msra.mxu0 0.0
    %869 = vmatprep.subr.mxu0 0.0
    %870 = vmatpush1.msra.mxu0 0.0
    %871 = vmatprep.subr.mxu0 0.0
    %872 = vmatpush1.msra.mxu0 0.0
    %873 = vmatprep.subr.mxu0 0.0
    %874 = vmatpush1.msra.mxu0 0.0
    %875 = vmatprep.subr.mxu0 0.0
    %876 = vmatpush1.msra.mxu0 0.0
    %877 = vmatprep.subr.mxu0 0.0
    %878 = vmatpush1.msra.mxu0 0.0
    %879 = vmatprep.subr.mxu0 0.0
    %880 = vmatpush1.msra.mxu0 0.0
    %881 = vmatprep.subr.mxu0 0.0
    %882 = vmatpush1.msra.mxu0 0.0
    %883 = vmatprep.subr.mxu0 0.0
    %884 = vmatpush1.msra.mxu0 %v369
    %885 = vmatprep.subr.mxu0 0.0
    %886 = vmatpush1.msra.mxu0 %v368
    %887 = vmatprep.subr.mxu0 0.0
    %888 = vmatpush1.msra.mxu0 %v367
    %889 = vmatprep.subr.mxu0 0.0
    %890 = vmatpush1.msra.mxu0 %v366
    %891 = vmatprep.subr.mxu0 0.0
    %892 = vmatpush2.msra.mxu0 0.0
    %893 = vmatprep.subr.mxu0 0.0
    %894 = vmatpush2.msra.mxu0 0.0
    %895 = vmatprep.subr.mxu0 0.0
    %896 = vmatpush2.msra.mxu0 0.0
    %897 = vmatprep.subr.mxu0 0.0
    %898 = vmatpush2.msra.mxu0 0.0
    %899 = vmatprep.subr.mxu0 0.0
    %900 = vmatpush2.msra.mxu0 0.0
    %901 = vmatprep.subr.mxu0 0.0
    %902 = vmatpush2.msra.mxu0 0.0
    %903 = vmatprep.subr.mxu0 0.0
    %904 = vmatpush2.msra.mxu0 0.0
    %905 = vmatprep.subr.mxu0 0.0
    %906 = vmatpush2.msra.mxu0 0.0
    %907 = vmatprep.subr.mxu0 0.0
    %908 = vmatpush2.msra.mxu0 0.0
    %909 = vmatprep.subr.mxu0 0.0
    %910 = vmatpush2.msra.mxu0 0.0
    %911 = vmatprep.subr.mxu0 0.0
    %912 = vmatpush2.msra.mxu0 0.0
    %913 = vmatprep.subr.mxu0 0.0
    %914 = vmatpush2.msra.mxu0 0.0
    %915 = vmatprep.subr.mxu0 0.0
    %916 = vmatpush2.msra.mxu0 0.0
    %917 = vmatprep.subr.mxu0 0.0
    %918 = vmatpush2.msra.mxu0 0.0
    %919 = vmatprep.subr.mxu0 0.0
    %920 = vmatpush2.msra.mxu0 0.0
    %921 = vmatprep.subr.mxu0 0.0
    %922 = vmatpush2.msra.mxu0 0.0
    %923 = vmatprep.mubr.f32.mxu0 0.0
    %924 = vmatmul.mubr.f32.gmra.mxu0 %v787
    %v925 = vpop.f32.mrf.mxu0
    %v926 = vadd.f32 0.0, %v925
    %v927 = vpop.f32.mrf.mxu0
    %928 = vdwg.mxu0
    %929 = vmatprep.subr.mxu0 0.0
    %930 = vmatpush1.msra.mxu0 0.0
    %931 = vmatprep.subr.mxu0 0.0
    %932 = vmatpush1.msra.mxu0 0.0
    %933 = vmatprep.subr.mxu0 0.0
    %934 = vmatpush1.msra.mxu0 0.0
    %935 = vmatprep.subr.mxu0 0.0
    %936 = vmatpush1.msra.mxu0 0.0
    %937 = vmatprep.subr.mxu0 0.0
    %938 = vmatpush1.msra.mxu0 0.0
    %939 = vmatprep.subr.mxu0 0.0
    %940 = vmatpush1.msra.mxu0 0.0
    %941 = vmatprep.subr.mxu0 0.0
    %942 = vmatpush1.msra.mxu0 0.0
    %943 = vmatprep.subr.mxu0 0.0
    %944 = vmatpush1.msra.mxu0 0.0
    %945 = vmatprep.subr.mxu0 0.0
    %946 = vmatpush1.msra.mxu0 0.0
    %947 = vmatprep.subr.mxu0 0.0
    %948 = vmatpush1.msra.mxu0 0.0
    %949 = vmatprep.subr.mxu0 0.0
    %950 = vmatpush1.msra.mxu0 0.0
    %951 = vmatprep.subr.mxu0 0.0
    %952 = vmatpush1.msra.mxu0 0.0
    %953 = vmatprep.subr.mxu0 0.0
    %954 = vmatpush1.msra.mxu0 %v444
    %955 = vmatprep.subr.mxu0 0.0
    %956 = vmatpush1.msra.mxu0 %v443
    %957 = vmatprep.subr.mxu0 0.0
    %958 = vmatpush1.msra.mxu0 %v442
    %959 = vmatprep.subr.mxu0 0.0
    %960 = vmatpush1.msra.mxu0 %v441
    %961 = vmatprep.subr.mxu0 0.0
    %962 = vmatpush2.msra.mxu0 0.0
    %963 = vmatprep.subr.mxu0 0.0
    %964 = vmatpush2.msra.mxu0 0.0
    %965 = vmatprep.subr.mxu0 0.0
    %966 = vmatpush2.msra.mxu0 0.0
    %967 = vmatprep.subr.mxu0 0.0
    %968 = vmatpush2.msra.mxu0 0.0
    %969 = vmatprep.subr.mxu0 0.0
    %970 = vmatpush2.msra.mxu0 0.0
    %971 = vmatprep.subr.mxu0 0.0
    %972 = vmatpush2.msra.mxu0 0.0
    %973 = vmatprep.subr.mxu0 0.0
    %974 = vmatpush2.msra.mxu0 0.0
    %975 = vmatprep.subr.mxu0 0.0
    %976 = vmatpush2.msra.mxu0 0.0
    %977 = vmatprep.subr.mxu0 0.0
    %978 = vmatpush2.msra.mxu0 0.0
    %979 = vmatprep.subr.mxu0 0.0
    %980 = vmatpush2.msra.mxu0 0.0
    %981 = vmatprep.subr.mxu0 0.0
    %982 = vmatpush2.msra.mxu0 0.0
    %983 = vmatprep.subr.mxu0 0.0
    %984 = vmatpush2.msra.mxu0 0.0
    %985 = vmatprep.subr.mxu0 0.0
    %986 = vmatpush2.msra.mxu0 0.0
    %987 = vmatprep.subr.mxu0 0.0
    %988 = vmatpush2.msra.mxu0 0.0
    %989 = vmatprep.subr.mxu0 0.0
    %990 = vmatpush2.msra.mxu0 0.0
    %991 = vmatprep.subr.mxu0 0.0
    %992 = vmatpush2.msra.mxu0 0.0
    %993 = vmatprep.mubr.f32.mxu0 0.0
    %994 = vmatmul.mubr.f32.gmra.mxu0 %v787
    %v995 = vpop.f32.mrf.mxu0
    %v996 = vadd.f32 0.0, %v995
    %v997 = vpop.f32.mrf.mxu0
    %998 = vdwg.mxu0
    %999 = vmatprep.subr.mxu0 0.0
    %1000 = vmatpush1.msra.mxu0 0.0
    %1001 = vmatprep.subr.mxu0 0.0
    %1002 = vmatpush1.msra.mxu0 0.0
    %1003 = vmatprep.subr.mxu0 0.0
    %1004 = vmatpush1.msra.mxu0 0.0
    %1005 = vmatprep.subr.mxu0 0.0
    %1006 = vmatpush1.msra.mxu0 0.0
    %1007 = vmatprep.subr.mxu0 0.0
    %1008 = vmatpush1.msra.mxu0 0.0
    %1009 = vmatprep.subr.mxu0 0.0
    %1010 = vmatpush1.msra.mxu0 0.0
    %1011 = vmatprep.subr.mxu0 0.0
    %1012 = vmatpush1.msra.mxu0 0.0
    %1013 = vmatprep.subr.mxu0 0.0
    %1014 = vmatpush1.msra.mxu0 0.0
    %1015 = vmatprep.subr.mxu0 0.0
    %1016 = vmatpush1.msra.mxu0 0.0
    %1017 = vmatprep.subr.mxu0 0.0
    %1018 = vmatpush1.msra.mxu0 0.0
    %1019 = vmatprep.subr.mxu0 0.0
    %1020 = vmatpush1.msra.mxu0 0.0
    %1021 = vmatprep.subr.mxu0 0.0
    %1022 = vmatpush1.msra.mxu0 0.0
    %1023 = vmatprep.subr.mxu0 0.0
    %1024 = vmatpush1.msra.mxu0 %v519
    %1025 = vmatprep.subr.mxu0 0.0
    %1026 = vmatpush1.msra.mxu0 %v518
    %1027 = vmatprep.subr.mxu0 0.0
    %1028 = vmatpush1.msra.mxu0 %v517
    %1029 = vmatprep.subr.mxu0 0.0
    %1030 = vmatpush1.msra.mxu0 %v516
    %1031 = vmatprep.subr.mxu0 0.0
    %1032 = vmatpush2.msra.mxu0 0.0
    %1033 = vmatprep.subr.mxu0 0.0
    %1034 = vmatpush2.msra.mxu0 0.0
    %1035 = vmatprep.subr.mxu0 0.0
    %1036 = vmatpush2.msra.mxu0 0.0
    %1037 = vmatprep.subr.mxu0 0.0
    %1038 = vmatpush2.msra.mxu0 0.0
    %1039 = vmatprep.subr.mxu0 0.0
    %1040 = vmatpush2.msra.mxu0 0.0
    %1041 = vmatprep.subr.mxu0 0.0
    %1042 = vmatpush2.msra.mxu0 0.0
    %1043 = vmatprep.subr.mxu0 0.0
    %1044 = vmatpush2.msra.mxu0 0.0
    %1045 = vmatprep.subr.mxu0 0.0
    %1046 = vmatpush2.msra.mxu0 0.0
    %1047 = vmatprep.subr.mxu0 0.0
    %1048 = vmatpush2.msra.mxu0 0.0
    %1049 = vmatprep.subr.mxu0 0.0
    %1050 = vmatpush2.msra.mxu0 0.0
    %1051 = vmatprep.subr.mxu0 0.0
    %1052 = vmatpush2.msra.mxu0 0.0
    %1053 = vmatprep.subr.mxu0 0.0
    %1054 = vmatpush2.msra.mxu0 0.0
    %1055 = vmatprep.subr.mxu0 0.0
    %1056 = vmatpush2.msra.mxu0 0.0
    %1057 = vmatprep.subr.mxu0 0.0
    %1058 = vmatpush2.msra.mxu0 0.0
    %1059 = vmatprep.subr.mxu0 0.0
    %1060 = vmatpush2.msra.mxu0 0.0
    %1061 = vmatprep.subr.mxu0 0.0
    %1062 = vmatpush2.msra.mxu0 0.0
    %1063 = vmatprep.mubr.f32.mxu0 0.0
    %1064 = vmatmul.mubr.f32.gmra.mxu0 %v787
    %v1065 = vpop.f32.mrf.mxu0
    %v1066 = vadd.f32 0.0, %v1065
    %v1067 = vpop.f32.mrf.mxu0
    %1068 = vdwg.mxu0
    %1069 = vxpose.xlu0.b32.start [1/16] %v856, 128
    %1070 = vxpose.xlu0.b32.cont [2/16] %v926, 128
    %1071 = vxpose.xlu0.b32.cont [3/16] %v996, 128
    %1072 = vxpose.xlu0.b32.cont [4/16] %v1066, 128
    %1073 = vxpose.xlu0.b32.cont [5/16] 0.0, 128
    %1074 = vxpose.xlu0.b32.cont [6/16] 0.0, 128
    %1075 = vxpose.xlu0.b32.cont [7/16] 0.0, 128
    %1076 = vxpose.xlu0.b32.cont [8/16] 0.0, 128
    %1077 = vxpose.xlu0.b32.cont [9/16] 0.0, 128
    %1078 = vxpose.xlu0.b32.cont [10/16] 0.0, 128
    %1079 = vxpose.xlu0.b32.cont [11/16] 0.0, 128
    %1080 = vxpose.xlu0.b32.cont [12/16] 0.0, 128
    %1081 = vxpose.xlu0.b32.cont [13/16] 0.0, 128
    %1082 = vxpose.xlu0.b32.cont [14/16] 0.0, 128
    %1083 = vxpose.xlu0.b32.cont [15/16] 0.0, 128
    %1084 = vxpose.xlu0.b32.end [16/16] 0.0, 128
    %v1085 = vpop.trf.xlu0
    %v1086 = vpop.trf.xlu0
    %v1087 = vpop.trf.xlu0
    %v1088 = vpop.trf.xlu0
    %v1089 = vpop.trf.xlu0
    %v1090 = vpop.trf.xlu0
    %v1091 = vpop.trf.xlu0
    %v1092 = vpop.trf.xlu0
    %v1093 = vpop.trf.xlu0
    %v1094 = vpop.trf.xlu0
    %v1095 = vpop.trf.xlu0
    %v1096 = vpop.trf.xlu0
    %v1097 = vpop.trf.xlu0
    %v1098 = vpop.trf.xlu0
    %v1099 = vpop.trf.xlu0
    %v1100 = vpop.trf.xlu0
    %v1101 = vld [vmem:[%s3] sm:$0xff]
    %v1102 = vld [vmem:[%s3 + $0x8] sm:$0xff]
    %v1103 = vld [vmem:[%s3 + $0x10] sm:$0xff]
    %v1104 = vld [vmem:[%s3 + $0x18] sm:$0xff]
    %v1105 = vld [vmem:[%s4] sm:$0x1]
    %v1107 = vlaneseq
    %v1108 = vshrl.u32 %v1107, 7
    %v1109 = vsub.s32 0, %v1108
    %v1110 = vrot.slane %v1105, %v1109
    %v1113 = vsel %vm40, %v606, 0
    %v1116 = vsel %vm40, %v1085, 0
    %1118 = vmatprep.subr.mxu0 0.0
    %1119 = vmatpush1.msra.mxu0 0.0
    %1120 = vmatprep.subr.mxu0 0.0
    %1121 = vmatpush1.msra.mxu0 0.0
    %1122 = vmatprep.subr.mxu0 0.0
    %1123 = vmatpush1.msra.mxu0 0.0
    %1124 = vmatprep.subr.mxu0 0.0
    %1125 = vmatpush1.msra.mxu0 0.0
    %1126 = vmatprep.subr.mxu0 0.0
    %1127 = vmatpush1.msra.mxu0 0.0
    %1128 = vmatprep.subr.mxu0 0.0
    %1129 = vmatpush1.msra.mxu0 0.0
    %1130 = vmatprep.subr.mxu0 0.0
    %1131 = vmatpush1.msra.mxu0 0.0
    %1132 = vmatprep.subr.mxu0 0.0
    %1133 = vmatpush1.msra.mxu0 0.0
    %1134 = vmatprep.subr.mxu0 0.0
    %1135 = vmatpush1.msra.mxu0 0.0
    %1136 = vmatprep.subr.mxu0 0.0
    %1137 = vmatpush1.msra.mxu0 0.0
    %1138 = vmatprep.subr.mxu0 0.0
    %1139 = vmatpush1.msra.mxu0 0.0
    %1140 = vmatprep.subr.mxu0 0.0
    %1141 = vmatpush1.msra.mxu0 0.0
    %1142 = vmatprep.subr.mxu0 0.0
    %1143 = vmatpush1.msra.mxu0 %v1104
    %1144 = vmatprep.subr.mxu0 0.0
    %1145 = vmatpush1.msra.mxu0 %v1103
    %1146 = vmatprep.subr.mxu0 0.0
    %1147 = vmatpush1.msra.mxu0 %v1102
    %1148 = vmatprep.subr.mxu0 0.0
    %1149 = vmatpush1.msra.mxu0 %v1101
    %1150 = vmatprep.subr.mxu0 0.0
    %1151 = vmatpush2.msra.mxu0 0.0
    %1152 = vmatprep.subr.mxu0 0.0
    %1153 = vmatpush2.msra.mxu0 0.0
    %1154 = vmatprep.subr.mxu0 0.0
    %1155 = vmatpush2.msra.mxu0 0.0
    %1156 = vmatprep.subr.mxu0 0.0
    %1157 = vmatpush2.msra.mxu0 0.0
    %1158 = vmatprep.subr.mxu0 0.0
    %1159 = vmatpush2.msra.mxu0 0.0
    %1160 = vmatprep.subr.mxu0 0.0
    %1161 = vmatpush2.msra.mxu0 0.0
    %1162 = vmatprep.subr.mxu0 0.0
    %1163 = vmatpush2.msra.mxu0 0.0
    %1164 = vmatprep.subr.mxu0 0.0
    %1165 = vmatpush2.msra.mxu0 0.0
    %1166 = vmatprep.subr.mxu0 0.0
    %1167 = vmatpush2.msra.mxu0 0.0
    %1168 = vmatprep.subr.mxu0 0.0
    %1169 = vmatpush2.msra.mxu0 0.0
    %1170 = vmatprep.subr.mxu0 0.0
    %1171 = vmatpush2.msra.mxu0 0.0
    %1172 = vmatprep.subr.mxu0 0.0
    %1173 = vmatpush2.msra.mxu0 0.0
    %1174 = vmatprep.subr.mxu0 0.0
    %1175 = vmatpush2.msra.mxu0 0.0
    %1176 = vmatprep.subr.mxu0 0.0
    %1177 = vmatpush2.msra.mxu0 0.0
    %1178 = vmatprep.subr.mxu0 0.0
    %1179 = vmatpush2.msra.mxu0 0.0
    %1180 = vmatprep.subr.mxu0 0.0
    %1181 = vmatpush2.msra.mxu0 0.0
    %1182 = vmatprep.mubr.f32.mxu0 0.0
    %1183 = vmatmul.mubr.f32.gmra.mxu0 %v1113
    %v1184 = vpop.f32.mrf.mxu0
    %v1185 = vadd.f32 %v1110, %v1184
    %v1186 = vpop.f32.mrf.mxu0
    %1187 = vmatprep.mubr.f32.mxu0 0.0
    %1188 = vmatmul.mubr.f32.gmra.mxu0 %v1116
    %v1189 = vpop.f32.mrf.mxu0
    %v1190 = vadd.f32 %v1110, %v1189
    %v1191 = vpop.f32.mrf.mxu0
    %1192 = vdwg.mxu0
    %1193 = vst.msk [vmem:[#allocation2] sm:$0xff] %vm40, %v1185
    %1194 = vst.msk [vmem:[#allocation2 + $0x8] sm:$0xff] %vm40, %v1190
    // Predicated region
    $region30: #{tpu_custom_call.1} parent=1 // pred_check
      _
    $region31: #{tpu_custom_call.1} parent=1 // pred_check_branch
      %1196 = sbr.rel (0) target = $region33
    $region32: #{tpu_custom_call.1} parent=1 // pred_region
      %s1198 = ssub.s32 256, 256
      %1199 = vsyncadd [#allocation3], %s1198
      %s1200 = sshll.u32 [#allocation2], 4
      %s1201 = int_to_ptr.vmem [resolvable:$true] %s1200
      %1206 = dma.vmem_to_hbm [thread:$0]  %s1201, 256, %s7, [#allocation3], 128, 128, 8
    $region33: #{tpu_custom_call.1} parent=1 // pred_fallthru
      _
    // Predicated region
    $region34: #{tpu_custom_call.1} parent=1 // pred_check
      _
    $region35: #{tpu_custom_call.1} parent=1 // pred_check_branch
      %1208 = sbr.rel (0) target = $region37
    $region36: #{tpu_custom_call.1} parent=1 // pred_region
      %1209 = dma.done [#allocation3], 256
    $region37: #{tpu_custom_call.1} parent=1 // pred_fallthru
      _
    %1210 = vsyncpa [#allocation3], 1

</llo_original>
